<compile_context>
chip_gen: v5e
topology: v5e:2x2
jax: 0.10.0
libtpu: 0.0.40
codegen_flags: <defaults>
</compile_context>

<pallas_src>
import functools

import jax
import jax.numpy as jnp
from jax.experimental import pallas as pl
from jax.experimental.pallas import tpu as pltpu


def _poly1_ce_kernel(logits_ref, labels_ref, out_ref, *, epsilon, num_classes):
    # logits_ref: [C, R, 128]   (classes leading, samples = rows x lanes)
    # labels_ref: [R, 128] int32
    # out_ref:    [R, 128] per-sample loss
    labels = labels_ref[...]

    if num_classes == 2:
        # Production siamban shape.  pt = sigmoid(l_true - l_other) is the
        # exact 2-class softmax probability; no running max / denom needed.
        l0 = logits_ref[0].astype(jnp.float32)
        l1 = logits_ref[1].astype(jnp.float32)
        is1 = labels == 1
        chosen = jnp.where(is1, l1, l0)
        other = jnp.where(is1, l0, l1)
        pt = 1.0 / (1.0 + jnp.exp(other - chosen))        # EUP exp + exact div
    else:
        rows = [logits_ref[c].astype(jnp.float32) for c in range(num_classes)]
        m = rows[0]
        for c in range(1, num_classes):
            m = jnp.maximum(m, rows[c])
        denom = jnp.zeros_like(m)
        chosen = jnp.zeros_like(m)
        chosen_exp = jnp.zeros_like(m)
        for c in range(num_classes):
            e = jnp.exp(rows[c] - m)
            denom = denom + e
            sel = labels == c
            chosen = jnp.where(sel, rows[c], chosen)
            chosen_exp = jnp.where(sel, e, chosen_exp)
        pt = chosen_exp / denom                            # exact divide

    # CE exactly as F.nll_loss applied to RAW logits (PyTorch module quirk):
    # loss = -chosen + eps*(1 - pt) = (eps - chosen) - eps*pt
    out_ref[...] = ((epsilon - chosen) - epsilon * pt).astype(out_ref.dtype)


def poly1_cross_entropy_loss(logits, labels, *, num_classes: int = 2,
                             epsilon: float = 1.0, reduction: str = "none",
                             tile_rows_max: int = 1024):
    """JAX/Pallas equivalent of Poly1CrossEntropyLoss.forward.

    logits: [N, num_classes] float array
    labels: [N] integer array
    """
    assert logits.ndim == 2 and logits.shape[1] == num_classes
    n = logits.shape[0]
    dtype = logits.dtype

    lane, sub = 128, 8
    n_pad = pl.cdiv(n, lane) * lane          # pad only to a lane multiple (tiny)
    r_total = n_pad // lane

    # Layout plumbing: classes -> leading dim, samples -> [rows, 128 lanes].
    # allow_input_fusion lets XLA fuse this pad/transpose/reshape into the
    # pallas_call input DMA instead of materialising it in HBM.
    logits_crl = jnp.pad(logits, ((0, n_pad - n), (0, 0))).T.reshape(
        num_classes, r_total, lane)
    labels_rl = jnp.pad(labels.astype(jnp.int32), (0, n_pad - n)).reshape(
        r_total, lane)

    # Row tile: big (amortise per-step overhead) but >= 2 grid steps when the
    # problem allows it (v7x megacore), multiple of 8 sublanes, VMEM-safe cap.
    if r_total <= sub:
        tile_r = r_total                     # tiny problem: one full block
    else:
        tile_r = min(tile_rows_max, pl.cdiv(pl.cdiv(r_total, 2), sub) * sub)
    grid = (pl.cdiv(r_total, tile_r),)

    out = pl.pallas_call(
        functools.partial(_poly1_ce_kernel, epsilon=float(epsilon),
                          num_classes=num_classes),
        out_shape=jax.ShapeDtypeStruct((r_total, lane), dtype),
        grid=grid,
        in_specs=[
            pl.BlockSpec((num_classes, tile_r, lane), lambda i: (0, i, 0)),
            pl.BlockSpec((tile_r, lane), lambda i: (i, 0)),
        ],
        out_specs=pl.BlockSpec((tile_r, lane), lambda i: (i, 0)),
        compiler_params=pltpu.CompilerParams(
            dimension_semantics=("parallel",),
            allow_input_fusion=[True, True]),
    )(logits_crl, labels_rl)

    poly1 = out.reshape(-1)[:n]              # drop lane padding (free reshape)

    # Reduction is trivial glue on a small [N] vector; kept in plain JAX.
    if reduction == "mean":
        poly1 = poly1.mean()
    elif reduction == "sum":
        poly1 = poly1.sum()
    return poly1


def _reference(logits, labels, num_classes, epsilon, reduction):
    onehot = jax.nn.one_hot(labels, num_classes, dtype=logits.dtype)
    pt = jnp.sum(onehot * jax.nn.softmax(logits, axis=-1), axis=-1)
    ce = -jnp.take_along_axis(logits, labels[:, None].astype(jnp.int32),
                              axis=-1)[:, 0]
    poly1 = ce + epsilon * (1.0 - pt)
    if reduction == "mean":
        poly1 = poly1.mean()
    elif reduction == "sum":
        poly1 = poly1.sum()
    return poly1


if __name__ == "__main__":
    key = jax.random.PRNGKey(0)
    k1, k2, k3, k4, k5, k6 = jax.random.split(key, 6)

    # Exact divide / sigmoid path: only f32 rounding differences vs reference.
    ATOL, RTOL = 2e-5, 1e-5

    # Case 1: canonical module shape — N samples, 2 classes.
    N, NUM_CLASSES, EPSILON = 8, 2, 1.0
    logits = jax.random.normal(k1, (N, NUM_CLASSES), dtype=jnp.float32)
    labels = jax.random.randint(k2, (N,), 0, NUM_CLASSES, dtype=jnp.int32)

    out = jax.block_until_ready(
        poly1_cross_entropy_loss(logits, labels, num_classes=NUM_CLASSES,
                                 epsilon=EPSILON, reduction="none"))
    ref = _reference(logits, labels, NUM_CLASSES, EPSILON, "none")
    assert out.shape == (N,)
    assert jnp.allclose(out, ref, atol=ATOL, rtol=RTOL), (out, ref)

    out_mean = jax.block_until_ready(
        poly1_cross_entropy_loss(logits, labels, num_classes=NUM_CLASSES,
                                 epsilon=EPSILON, reduction="mean"))
    ref_mean = _reference(logits, labels, NUM_CLASSES, EPSILON, "mean")
    assert jnp.allclose(out_mean, ref_mean, atol=ATOL, rtol=RTOL), (out_mean, ref_mean)

    # Case 2: N not a multiple of 128 (lane padding path, single block).
    N2 = 300
    logits2 = jax.random.normal(k3, (N2, NUM_CLASSES), dtype=jnp.float32)
    labels2 = jax.random.randint(k4, (N2,), 0, NUM_CLASSES, dtype=jnp.int32)
    out2 = jax.block_until_ready(
        poly1_cross_entropy_loss(logits2, labels2, num_classes=NUM_CLASSES,
                                 epsilon=EPSILON, reduction="none"))
    ref2 = _reference(logits2, labels2, NUM_CLASSES, EPSILON, "none")
    assert out2.shape == (N2,)
    assert jnp.allclose(out2, ref2, atol=ATOL, rtol=RTOL), (out2, ref2)

    # Case 3: multi-step grid with a partial last row-block + general C>2 path.
    N3, C3, EPS3 = 2100, 5, 2.0
    logits3 = jax.random.normal(k5, (N3, C3), dtype=jnp.float32)
    labels3 = jax.random.randint(k6, (N3,), 0, C3, dtype=jnp.int32)
    out3 = jax.block_until_ready(
        poly1_cross_entropy_loss(logits3, labels3, num_classes=C3,
                                 epsilon=EPS3, reduction="none"))
    ref3 = _reference(logits3, labels3, C3, EPS3, "none")
    assert out3.shape == (N3,)
    assert jnp.allclose(out3, ref3, atol=ATOL, rtol=RTOL), (out3, ref3)

    out3_sum = jax.block_until_ready(
        poly1_cross_entropy_loss(logits3, labels3, num_classes=C3,
                                 epsilon=EPS3, reduction="sum"))
    ref3_sum = _reference(logits3, labels3, C3, EPS3, "sum")
    assert jnp.allclose(out3_sum, ref3_sum, atol=5e-2, rtol=1e-5), (out3_sum, ref3_sum)

    print("KERNEL_OK")
</pallas_src>

<mosaic_0001>
module attributes {stable_mosaic.version = 11 : i64} {
  func.func @_poly1_ce_kernel(%arg0: i32, %arg1: memref<2x1x128xf32, #tpu.memory_space<vmem>>, %arg2: memref<1x128xi32, #tpu.memory_space<vmem>>, %arg3: memref<1x128xf32, #tpu.memory_space<vmem>>) attributes {dimension_semantics = [#tpu.dimension_semantics<parallel>], iteration_bounds = array<i64: 1>, scalar_prefetch = 0 : i64, scratch_operands = 0 : i64, tpu.core_type = #tpu.core_type<tc>, window_params = [{transform_indices = @transform_0, window_bounds = array<i64: 2, 1, 128>}, {transform_indices = @transform_1, window_bounds = array<i64: 1, 128>}, {transform_indices = @transform_2, window_bounds = array<i64: 1, 128>}]} {
    %c0 = arith.constant 0 : index
    %c0_0 = arith.constant 0 : index
    %0 = vector.load %arg2[%c0, %c0_0] : memref<1x128xi32, #tpu.memory_space<vmem>>, vector<1x128xi32>
    %c0_1 = arith.constant 0 : index
    %c0_2 = arith.constant 0 : index
    %c0_3 = arith.constant 0 : index
    %1 = vector.load %arg1[%c0_1, %c0_2, %c0_3] : memref<2x1x128xf32, #tpu.memory_space<vmem>>, vector<1x1x128xf32>
    %2 = vector.shape_cast %1 : vector<1x1x128xf32> to vector<1x128xf32>
    %c1 = arith.constant 1 : index
    %c0_4 = arith.constant 0 : index
    %c0_5 = arith.constant 0 : index
    %3 = vector.load %arg1[%c1, %c0_4, %c0_5] : memref<2x1x128xf32, #tpu.memory_space<vmem>>, vector<1x1x128xf32>
    %4 = vector.shape_cast %3 : vector<1x1x128xf32> to vector<1x128xf32>
    %c1_i32 = arith.constant 1 : i32
    %5 = vector.broadcast %c1_i32 : i32 to vector<1x128xi32>
    %6 = arith.cmpi eq, %0, %5 : vector<1x128xi32>
    %7 = arith.select %6, %4, %2 : vector<1x128xi1>, vector<1x128xf32>
    %8 = arith.select %6, %2, %4 : vector<1x128xi1>, vector<1x128xf32>
    %9 = arith.subf %8, %7 : vector<1x128xf32>
    %10 = math.exp %9 : vector<1x128xf32>
    %cst = arith.constant 1.000000e+00 : f32
    %11 = vector.broadcast %cst : f32 to vector<1x128xf32>
    %12 = arith.addf %11, %10 : vector<1x128xf32>
    %cst_6 = arith.constant 1.000000e+00 : f32
    %13 = vector.broadcast %cst_6 : f32 to vector<1x128xf32>
    %14 = arith.divf %13, %12 : vector<1x128xf32>
    %cst_7 = arith.constant 1.000000e+00 : f32
    %15 = vector.broadcast %cst_7 : f32 to vector<1x128xf32>
    %16 = arith.subf %15, %7 : vector<1x128xf32>
    %cst_8 = arith.constant 1.000000e+00 : f32
    %17 = vector.broadcast %cst_8 : f32 to vector<1x128xf32>
    %18 = arith.mulf %17, %14 : vector<1x128xf32>
    %19 = arith.subf %16, %18 : vector<1x128xf32>
    %c0_9 = arith.constant 0 : index
    %c0_10 = arith.constant 0 : index
    %20 = vector.load %arg3[%c0_9, %c0_10] : memref<1x128xf32, #tpu.memory_space<vmem>>, vector<1x128xf32>
    tpu.vector_store %arg3[%c0_9, %c0_10], %19 {strides = array<i32>} : memref<1x128xf32, #tpu.memory_space<vmem>>, vector<1x128xf32>,
    return
  }
  func.func @transform_0(%arg0: i32) -> (i32, i32, i32) {
    %c0_i32 = arith.constant 0 : i32
    %c0_i32_0 = arith.constant 0 : i32
    %c0_i32_1 = arith.constant 0 : i32
    return %c0_i32, %arg0, %c0_i32_0 : i32, i32, i32
  }
  func.func @transform_1(%arg0: i32) -> (i32, i32) {
    %c0_i32 = arith.constant 0 : i32
    %c0_i32_0 = arith.constant 0 : i32
    return %arg0, %c0_i32 : i32, i32
  }
  func.func @transform_2(%arg0: i32) -> (i32, i32) {
    %c0_i32 = arith.constant 0 : i32
    %c0_i32_0 = arith.constant 0 : i32
    return %arg0, %c0_i32 : i32, i32
  }
}

</mosaic_0001>

<llo_original>
// kernel: tpu_custom_call.1
$region0: #{tpu_custom_call.1}
  #allocation0 [shape = 'u32[]', space=smem, size = 0x4, offset = 0x4, fixed_abs, tag = 'smem constant byte address 0x4 - core index']
  #allocation1 [shape = 'u32[72,128]{1,0:T(1,128)}', space=vmem, size = 0x9000, scoped, tag = 'internal scratch']
  %s0 = inlined_call_operand.hbm [shape: f32[2,1,128], index: 0, kind: input, shape index: {}]
  %s1 = inlined_call_operand.hbm [shape: s32[1,128], index: 1, kind: input, shape index: {}]
  %s2 = inlined_call_operand.hbm [shape: f32[1,128], index: 2, kind: output, shape index: {}]
  %s3 = sld [smem:[#allocation0]]
  $region26: #{tpu_custom_call.1} parent=0
    _
  %s5 = ssub.s32 1, %s3
  %s6 = scalar_select 0, %s5, %s3
  $region1: #{tpu_custom_call.1} parent=0
    #allocation2 [shape = 'u8[1024]{0}', space=vmem, size = 0x400, scoped, tag = 'input window, operand 0, single buffered']
    #allocation3 [shape = 's32[1]{0}', space=sflag, size = 0x4, scoped, tag = 'scoped memory for tpu_custom_call.1']
    #allocation4 [shape = 's32[1]{0}', space=sflag, size = 0x4, scoped, tag = 'scoped memory for tpu_custom_call.1']
    #allocation5 [shape = 'u8[512]{0}', space=vmem, size = 0x400, scoped, tag = 'input window, operand 1, single buffered']
    #allocation6 [shape = 's32[1]{0}', space=sflag, size = 0x4, scoped, tag = 'scoped memory for tpu_custom_call.1']
    #allocation7 [shape = 'u8[512]{0}', space=vmem, size = 0x400, scoped, tag = 'output window, operand 0, single buffered']
    %7 = vsyncpa [#allocation3], 0
    %8 = vsyncpa [#allocation6], 0
    %9 = vsyncpa [#allocation4], 0
    // Predicated region
    $region2: #{tpu_custom_call.1} parent=1 // pred_check
      _
    $region3: #{tpu_custom_call.1} parent=1 // pred_check_branch
      %11 = sbr.rel (0) target = $region5
    $region4: #{tpu_custom_call.1} parent=1 // pred_region
      %13 = vsyncadd [#allocation3], 0
      %s14 = sshll.u32 %s0, 4
      %s15 = int_to_ptr.hbm [resolvable:$true] %s14
      %s16 = sshll.u32 [#allocation2], 4
      %s17 = int_to_ptr.vmem [resolvable:$true] %s16
      %22 = dma.hbm_to_vmem [thread:$0]  %s15, 32, %s17, [#allocation3], 16, 16, 1
    $region5: #{tpu_custom_call.1} parent=1 // pred_fallthru
      _
    // Predicated region
    $region6: #{tpu_custom_call.1} parent=1 // pred_check
      _
    $region7: #{tpu_custom_call.1} parent=1 // pred_check_branch
      %24 = sbr.rel (0) target = $region9
    $region8: #{tpu_custom_call.1} parent=1 // pred_region
      %26 = vsyncadd [#allocation6], 0
      %s28 = sshll.u32 %s1, 4
      %s29 = int_to_ptr.hbm [resolvable:$true] %s28
      %s30 = sshll.u32 [#allocation5], 4
      %s31 = int_to_ptr.vmem [resolvable:$true] %s30
      %33 = dma.hbm_to_vmem [thread:$0]  %s29, 16, %s31, [#allocation6]
    $region9: #{tpu_custom_call.1} parent=1 // pred_fallthru
      _
    // Predicated region
    $region10: #{tpu_custom_call.1} parent=1 // pred_check
      _
    $region11: #{tpu_custom_call.1} parent=1 // pred_check_branch
      %35 = sbr.rel (0) target = $region13
    $region12: #{tpu_custom_call.1} parent=1 // pred_region
      %37 = dma.done [#allocation3], 32
    $region13: #{tpu_custom_call.1} parent=1 // pred_fallthru
      _
    // Predicated region
    $region14: #{tpu_custom_call.1} parent=1 // pred_check
      _
    $region15: #{tpu_custom_call.1} parent=1 // pred_check_branch
      %39 = sbr.rel (0) target = $region17
    $region16: #{tpu_custom_call.1} parent=1 // pred_region
      %41 = dma.done [#allocation6], 16
    $region17: #{tpu_custom_call.1} parent=1 // pred_fallthru
      _
    %v42 = vld [vmem:[#allocation5] sm:$0x1]
    %v43 = vld [vmem:[#allocation2] sm:$0x1]
    %s44 = scalar_lea.vmem [#allocation2], 1
    %v45 = vld [vmem:[%s44] sm:$0x1]
    %vm46 = vcmp.eq.s32.totalorder %v42, 1
    %v47 = vsel %vm46, %v45, %v43
    %v48 = vsel %vm46, %v43, %v45
    %v49 = vsub.f32 %v48, %v47
    %v50 = vmul.f32 %v49, 1.442695
    %v51 = vpow.pop %v50
    %v52 = vadd.f32 %v51, 1.0
    %v53 = vrcp.pop %v52
    %v54 = vmul.f32 %v52, %v53
    %v55 = vsub.f32 1.0, %v54
    %v56 = vmul.f32 %v53, %v55
    %v57 = vadd.f32 %v53, %v56
    %vm58 = vweird.f32 %v52
    %vm59 = vweird.f32 %v53
    %vm60 = vmor %vm58, %vm59
    %v61 = vsel %vm60, %v53, %v57
    %v62 = vand.u32 2147483647, %v52
    %vm63 = vcmp.eq.f32.partialorder %v62, 8.507059e+37
    %v64 = vand.u32 %v52, 2147483648
    %v65 = vor.u32 1.1754944e-38, %v64
    %v66 = vsel %vm63, %v65, %v61
    %v67 = vmul.f32 1.0, %v66
    %v68 = vsub.f32 1.0, %v47
    %v69 = vsub.f32 %v68, %v67
    %70 = vst [vmem:[#allocation7] sm:$0x1] %v69
    // Predicated region
    $region18: #{tpu_custom_call.1} parent=1 // pred_check
      _
    $region19: #{tpu_custom_call.1} parent=1 // pred_check_branch
      %72 = sbr.rel (0) target = $region21
    $region20: #{tpu_custom_call.1} parent=1 // pred_region
      %74 = vsyncadd [#allocation4], 0
      %s76 = sshll.u32 [#allocation7], 4
      %s77 = int_to_ptr.vmem [resolvable:$true] %s76
      %s78 = sshll.u32 %s2, 4
      %s79 = int_to_ptr.hbm [resolvable:$true] %s78
      %81 = dma.vmem_to_hbm [thread:$0]  %s77, 16, %s79, [#allocation4]
    $region21: #{tpu_custom_call.1} parent=1 // pred_fallthru
      _
    // Predicated region
    $region22: #{tpu_custom_call.1} parent=1 // pred_check
      _
    $region23: #{tpu_custom_call.1} parent=1 // pred_check_branch
      %83 = sbr.rel (0) target = $region25
    $region24: #{tpu_custom_call.1} parent=1 // pred_region
      %85 = dma.done [#allocation4], 16
    $region25: #{tpu_custom_call.1} parent=1 // pred_fallthru
      _
    %86 = vsyncpa [#allocation3], 1
    %87 = vsyncpa [#allocation6], 1
    %88 = vsyncpa [#allocation4], 1

</llo_original>
